<compile_context>
chip_gen: v7x
topology: tpu7x:2x2x1
jax: 0.10.0
libtpu: 0.0.40
codegen_flags: <defaults>
</compile_context>

<pallas_src>
import math

import jax
import jax.numpy as jnp
from jax.experimental import pallas as pl
from jax.experimental.pallas import tpu as pltpu


def down_kernel(x_ref, scale_ref, shift_ref, w_ref, o_ref):
    # x_ref:     (4, t, gCin)  bf16  -- 2x2 pool positions x folded windows
    # scale_ref: (1, gCin)     bf16  -- folded BatchNorm scale (tiled g times)
    # shift_ref: (1, gCin)     bf16  -- folded BatchNorm shift (tiled g times)
    # w_ref:     (gCin, gCout) bf16  -- block-diagonal 1x1-conv weight
    # o_ref:     (t, gCout)    bf16
    scale = scale_ref[...]
    shift = shift_ref[...]
    w = w_ref[...]
    acc = None
    # Per-pool-position matmuls + running max: keeps the live f32 MXU result
    # at (t, gCout) instead of (4t, gCout); RHS stays resident so MXU cost is
    # unchanged.  BN + ReLU stay in bf16 (VPU); accumulation is f32.
    for k in range(4):
        y = jnp.maximum(x_ref[k] * scale + shift, 0.0)            # bf16 VPU
        r = jnp.dot(y, w, preferred_element_type=jnp.float32)     # (t, gCout) f32
        acc = r if acc is None else jnp.maximum(acc, r)
    o_ref[...] = acc.astype(o_ref.dtype)


def _cdiv(a, b):
    return -(-a // b)


def _rup(a, b):
    return _cdiv(a, b) * b


def _vmem_capacity_bytes():
    """Per-core physical VMEM; conservative (v7x-sized) fallback."""
    try:
        info = pltpu.get_tpu_info()
        for name in ("vmem_capacity_bytes", "vmem_size_bytes", "vmem_bytes"):
            v = getattr(info, name, None)
            if isinstance(v, int) and v > 0:
                return v
    except Exception:
        pass
    return 64 << 20


def down_forward(x_nchw, gamma, beta, conv_w, eps=1e-5, max_tile=1024,
                 nchw_out=True):
    N, Cin, H, W = x_nchw.shape
    Cout = conv_w.shape[0]
    assert H % 2 == 0 and W % 2 == 0

    # --- BatchNorm2d (training mode -> biased batch stats), ONE fused pass:
    #     sum and sum-of-squares together, var = E[x^2] - E[x]^2.
    xf = x_nchw.astype(jnp.float32)
    cnt = N * H * W
    s1 = jnp.sum(xf, axis=(0, 2, 3))
    s2 = jnp.sum(xf * xf, axis=(0, 2, 3))
    mean = s1 / cnt
    var = jnp.maximum(s2 / cnt - mean * mean, 0.0)
    inv = gamma.astype(jnp.float32) / jnp.sqrt(var + eps)
    scale_c = inv                                            # (Cin,)
    shift_c = beta.astype(jnp.float32) - mean * inv          # (Cin,)

    # --- lane-fold factor g: put g windows' channels on the lane axis so the
    #     kernel input/output are lane-dense; cap the block-diag weight size.
    g = 128 // math.gcd(Cin, 128)
    while g > 1 and (g * Cin) * (g * Cout) * 2 > (2 << 20):
        g //= 2
    gCin, gCout = g * Cin, g * Cout

    # --- glue: NCHW -> (4, P, Cin) pool-window layout, bf16 in HBM.
    x = jnp.transpose(x_nchw, (0, 2, 3, 1))                  # NHWC
    x = x.reshape(N, H // 2, 2, W // 2, 2, Cin)
    x = jnp.transpose(x, (2, 4, 0, 1, 3, 5))                 # (2,2,N,H/2,W/2,Cin)
    P = N * (H // 2) * (W // 2)
    x = x.reshape(4, P, Cin).astype(jnp.bfloat16)
    # TODO(synk): for deep stages (g == 1, Cin >= 256) skip this repack and
    # feed the kernel via strided BlockSpecs straight from the NHWC view.

    # --- tile selection along the folded-window axis.
    SUB = 16  # bf16 sublane pack; keeps blocks tile-aligned
    Pg = _cdiv(P, g)
    if Pg <= 2 * SUB:
        tile_pg = _rup(Pg, SUB)                              # single small step
    else:
        t4 = _rup(_cdiv(Pg, 4), SUB)                         # >=4 steps (2/core on v7x)
        if t4 >= 256:
            tile_pg = min(max_tile, t4)
        else:
            tile_pg = min(max_tile, _rup(_cdiv(Pg, 2), SUB))

    # Generation-aware VMEM budget + explicit compiler limit.
    vmem_cap = _vmem_capacity_bytes()                        # 128 MiB v5e/v6e, 64 MiB v7x
    vmem_limit = max(32 << 20, min(vmem_cap * 3 // 4, 96 << 20))
    blk_budget = vmem_limit - (6 << 20)                      # headroom for internals

    def _blk_bytes(t):
        return (2 * (4 * t * gCin * 2)        # double-buffered bf16 input block
                + 2 * (t * gCout * 2)         # double-buffered bf16 output block
                + t * gCin * 2                # bf16 BN/ReLU intermediate
                + 3 * t * gCout * 4           # f32 MXU result + running max
                + 2 * (gCin * gCout * 2)      # weight (double-buffered)
                + 2 * (4 * gCin * 2))         # scale/shift

    while tile_pg > SUB and _blk_bytes(tile_pg) > blk_budget:
        tile_pg = _rup(max(tile_pg // 2, SUB), SUB)

    Pg_pad = _rup(Pg, tile_pg)
    P_pad = Pg_pad * g
    if P_pad != P:
        x = jnp.pad(x, ((0, 0), (0, P_pad - P), (0, 0)))
    x = x.reshape(4, Pg_pad, gCin)                           # contiguous reshape

    scale = jnp.tile(scale_c.reshape(1, Cin), (1, g)).astype(jnp.bfloat16)
    shift = jnp.tile(shift_c.reshape(1, Cin), (1, g)).astype(jnp.bfloat16)

    # 1x1 conv weight (Cout, Cin, 1, 1) -> block-diagonal (gCin, gCout), bf16.
    w2 = conv_w[:, :, 0, 0].T.astype(jnp.float32)            # (Cin, Cout)
    w_big = jnp.kron(jnp.eye(g, dtype=jnp.float32), w2).astype(jnp.bfloat16)

    grid = (Pg_pad // tile_pg,)

    out = pl.pallas_call(
        down_kernel,
        out_shape=jax.ShapeDtypeStruct((Pg_pad, gCout), jnp.bfloat16),
        grid_spec=pltpu.PrefetchScalarGridSpec(
            num_scalar_prefetch=0,
            grid=grid,
            in_specs=[
                pl.BlockSpec((4, tile_pg, gCin), lambda i: (0, i, 0)),
                pl.BlockSpec((1, gCin), lambda i: (0, 0)),
                pl.BlockSpec((1, gCin), lambda i: (0, 0)),
                pl.BlockSpec((gCin, gCout), lambda i: (0, 0)),
            ],
            out_specs=pl.BlockSpec((tile_pg, gCout), lambda i: (i, 0)),
        ),
        compiler_params=pltpu.CompilerParams(
            dimension_semantics=("parallel",),
            vmem_limit_bytes=vmem_limit),
    )(x, scale, shift, w_big)

    # --- glue: (Pg_pad, gCout) bf16 -> (P, Cout) -> output layout.
    out = out.reshape(P_pad, Cout)[:P]                       # drop padded windows
    out = out.reshape(N, H // 2, W // 2, Cout)
    if not nchw_out:
        return out                                           # NHWC bf16 (for chaining)
    return jnp.transpose(out, (0, 3, 1, 2)).astype(jnp.float32)


def down_reference(x_nchw, gamma, beta, conv_w, eps=1e-5):
    """Pure-JAX reference matching the PyTorch forward (train-mode BN)."""
    mean = jnp.mean(x_nchw, axis=(0, 2, 3), keepdims=True)
    var = jnp.var(x_nchw, axis=(0, 2, 3), keepdims=True)
    y = (x_nchw - mean) / jnp.sqrt(var + eps)
    y = y * gamma.reshape(1, -1, 1, 1) + beta.reshape(1, -1, 1, 1)
    y = jnp.maximum(y, 0.0)
    z = jnp.einsum('nchw,oc->nohw', y, conv_w[:, :, 0, 0])
    N, Co, H, W = z.shape
    z = z.reshape(N, Co, H // 2, 2, W // 2, 2)
    return jnp.max(z, axis=(3, 5))


if __name__ == "__main__":
    key = jax.random.PRNGKey(0)
    k1, k2, k3, k4 = jax.random.split(key, 4)

    N, Cin, H, W = 2, 4, 16, 16
    Cout = 8

    x = jax.random.normal(k1, (N, Cin, H, W), dtype=jnp.float32)
    gamma = 1.0 + 0.1 * jax.random.normal(k2, (Cin,), dtype=jnp.float32)
    beta = 0.1 * jax.random.normal(k3, (Cin,), dtype=jnp.float32)
    conv_w = 0.5 * jax.random.normal(k4, (Cout, Cin, 1, 1), dtype=jnp.float32)

    fwd = jax.jit(down_forward)
    out = jax.block_until_ready(fwd(x, gamma, beta, conv_w))
    ref = down_reference(x, gamma, beta, conv_w)

    assert out.shape == (N, Cout, H // 2, W // 2), out.shape
    # bf16 activations/weights/output in the kernel -> loosened tolerance.
    max_err = float(jnp.max(jnp.abs(out - ref)))
    assert jnp.allclose(out, ref, atol=1.5e-1, rtol=5e-2), max_err
    print("KERNEL_OK")
</pallas_src>

<mosaic_0001>
module attributes {stable_mosaic.version = 11 : i64} {
  func.func @down_kernel(%arg0: i32, %arg1: memref<4x16x128xbf16, #tpu.memory_space<vmem>>, %arg2: memref<1x128xbf16, #tpu.memory_space<vmem>>, %arg3: memref<1x128xbf16, #tpu.memory_space<vmem>>, %arg4: memref<128x256xbf16, #tpu.memory_space<vmem>>, %arg5: memref<16x256xbf16, #tpu.memory_space<vmem>>) attributes {dimension_semantics = [#tpu.dimension_semantics<parallel>], iteration_bounds = array<i64: 1>, scalar_prefetch = 0 : i64, scratch_operands = 0 : i64, tpu.core_type = #tpu.core_type<tc>, window_params = [{transform_indices = @transform_0, window_bounds = array<i64: 4, 16, 128>}, {pipeline_mode = #tpu.pipeline_mode<synchronous>, transform_indices = @transform_1, window_bounds = array<i64: 1, 128>}, {pipeline_mode = #tpu.pipeline_mode<synchronous>, transform_indices = @transform_2, window_bounds = array<i64: 1, 128>}, {pipeline_mode = #tpu.pipeline_mode<synchronous>, transform_indices = @transform_3, window_bounds = array<i64: 128, 256>}, {transform_indices = @transform_4, window_bounds = array<i64: 16, 256>}]} {
    %c0 = arith.constant 0 : index
    %c0_0 = arith.constant 0 : index
    %0 = vector.load %arg2[%c0, %c0_0] : memref<1x128xbf16, #tpu.memory_space<vmem>>, vector<1x128xbf16>
    %c0_1 = arith.constant 0 : index
    %c0_2 = arith.constant 0 : index
    %1 = vector.load %arg3[%c0_1, %c0_2] : memref<1x128xbf16, #tpu.memory_space<vmem>>, vector<1x128xbf16>
    %c0_3 = arith.constant 0 : index
    %c0_4 = arith.constant 0 : index
    %2 = vector.load %arg4[%c0_3, %c0_4] : memref<128x256xbf16, #tpu.memory_space<vmem>>, vector<128x256xbf16>
    %c0_5 = arith.constant 0 : index
    %c0_6 = arith.constant 0 : index
    %c0_7 = arith.constant 0 : index
    %3 = vector.load %arg1[%c0_5, %c0_6, %c0_7] : memref<4x16x128xbf16, #tpu.memory_space<vmem>>, vector<1x16x128xbf16>
    %4 = vector.shape_cast %3 : vector<1x16x128xbf16> to vector<16x128xbf16>
    %5 = vector.broadcast %0 : vector<1x128xbf16> to vector<16x128xbf16>
    %6 = arith.mulf %4, %5 : vector<16x128xbf16>
    %7 = vector.broadcast %1 : vector<1x128xbf16> to vector<16x128xbf16>
    %8 = arith.addf %6, %7 : vector<16x128xbf16>
    %cst = arith.constant 0.000000e+00 : bf16
    %9 = vector.broadcast %cst : bf16 to vector<16x128xbf16>
    %10 = arith.maximumf %8, %9 : vector<16x128xbf16>
    %cst_8 = arith.constant dense<0.000000e+00> : vector<16x256xf32>
    %11 = tpu.matmul %10, %2, %cst_8 {dimension_numbers = #tpu.dot_dimension_numbers<[1], [0], [0], [1], [0, 0, 1, 1], [], []>} : vector<16x128xbf16>, vector<128x256xbf16>, vector<16x256xf32> -> vector<16x256xf32>
    %c1 = arith.constant 1 : index
    %c0_9 = arith.constant 0 : index
    %c0_10 = arith.constant 0 : index
    %12 = vector.load %arg1[%c1, %c0_9, %c0_10] : memref<4x16x128xbf16, #tpu.memory_space<vmem>>, vector<1x16x128xbf16>
    %13 = vector.shape_cast %12 : vector<1x16x128xbf16> to vector<16x128xbf16>
    %14 = vector.broadcast %0 : vector<1x128xbf16> to vector<16x128xbf16>
    %15 = arith.mulf %13, %14 : vector<16x128xbf16>
    %16 = vector.broadcast %1 : vector<1x128xbf16> to vector<16x128xbf16>
    %17 = arith.addf %15, %16 : vector<16x128xbf16>
    %cst_11 = arith.constant 0.000000e+00 : bf16
    %18 = vector.broadcast %cst_11 : bf16 to vector<16x128xbf16>
    %19 = arith.maximumf %17, %18 : vector<16x128xbf16>
    %cst_12 = arith.constant dense<0.000000e+00> : vector<16x256xf32>
    %20 = tpu.matmul %19, %2, %cst_12 {dimension_numbers = #tpu.dot_dimension_numbers<[1], [0], [0], [1], [0, 0, 1, 1], [], []>} : vector<16x128xbf16>, vector<128x256xbf16>, vector<16x256xf32> -> vector<16x256xf32>
    %21 = arith.maximumf %11, %20 : vector<16x256xf32>
    %c2 = arith.constant 2 : index
    %c0_13 = arith.constant 0 : index
    %c0_14 = arith.constant 0 : index
    %22 = vector.load %arg1[%c2, %c0_13, %c0_14] : memref<4x16x128xbf16, #tpu.memory_space<vmem>>, vector<1x16x128xbf16>
    %23 = vector.shape_cast %22 : vector<1x16x128xbf16> to vector<16x128xbf16>
    %24 = vector.broadcast %0 : vector<1x128xbf16> to vector<16x128xbf16>
    %25 = arith.mulf %23, %24 : vector<16x128xbf16>
    %26 = vector.broadcast %1 : vector<1x128xbf16> to vector<16x128xbf16>
    %27 = arith.addf %25, %26 : vector<16x128xbf16>
    %cst_15 = arith.constant 0.000000e+00 : bf16
    %28 = vector.broadcast %cst_15 : bf16 to vector<16x128xbf16>
    %29 = arith.maximumf %27, %28 : vector<16x128xbf16>
    %cst_16 = arith.constant dense<0.000000e+00> : vector<16x256xf32>
    %30 = tpu.matmul %29, %2, %cst_16 {dimension_numbers = #tpu.dot_dimension_numbers<[1], [0], [0], [1], [0, 0, 1, 1], [], []>} : vector<16x128xbf16>, vector<128x256xbf16>, vector<16x256xf32> -> vector<16x256xf32>
    %31 = arith.maximumf %21, %30 : vector<16x256xf32>
    %c3 = arith.constant 3 : index
    %c0_17 = arith.constant 0 : index
    %c0_18 = arith.constant 0 : index
    %32 = vector.load %arg1[%c3, %c0_17, %c0_18] : memref<4x16x128xbf16, #tpu.memory_space<vmem>>, vector<1x16x128xbf16>
    %33 = vector.shape_cast %32 : vector<1x16x128xbf16> to vector<16x128xbf16>
    %34 = vector.broadcast %0 : vector<1x128xbf16> to vector<16x128xbf16>
    %35 = arith.mulf %33, %34 : vector<16x128xbf16>
    %36 = vector.broadcast %1 : vector<1x128xbf16> to vector<16x128xbf16>
    %37 = arith.addf %35, %36 : vector<16x128xbf16>
    %cst_19 = arith.constant 0.000000e+00 : bf16
    %38 = vector.broadcast %cst_19 : bf16 to vector<16x128xbf16>
    %39 = arith.maximumf %37, %38 : vector<16x128xbf16>
    %cst_20 = arith.constant dense<0.000000e+00> : vector<16x256xf32>
    %40 = tpu.matmul %39, %2, %cst_20 {dimension_numbers = #tpu.dot_dimension_numbers<[1], [0], [0], [1], [0, 0, 1, 1], [], []>} : vector<16x128xbf16>, vector<128x256xbf16>, vector<16x256xf32> -> vector<16x256xf32>
    %41 = arith.maximumf %31, %40 : vector<16x256xf32>
    %42 = arith.truncf %41 : vector<16x256xf32> to vector<16x256xbf16>
    %c0_21 = arith.constant 0 : index
    %c0_22 = arith.constant 0 : index
    %43 = vector.load %arg5[%c0_21, %c0_22] : memref<16x256xbf16, #tpu.memory_space<vmem>>, vector<16x256xbf16>
    tpu.vector_store %arg5[%c0_21, %c0_22], %42 {strides = array<i32>} : memref<16x256xbf16, #tpu.memory_space<vmem>>, vector<16x256xbf16>,
    return
  }
  func.func @transform_0(%arg0: i32) -> (i32, i32, i32) {
    %c0_i32 = arith.constant 0 : i32
    %c0_i32_0 = arith.constant 0 : i32
    %c0_i32_1 = arith.constant 0 : i32
    return %c0_i32, %arg0, %c0_i32_0 : i32, i32, i32
  }
  func.func @transform_1(%arg0: i32) -> (i32, i32) {
    %c0_i32 = arith.constant 0 : i32
    %c0_i32_0 = arith.constant 0 : i32
    %c0_i32_1 = arith.constant 0 : i32
    return %c0_i32, %c0_i32_0 : i32, i32
  }
  func.func @transform_2(%arg0: i32) -> (i32, i32) {
    %c0_i32 = arith.constant 0 : i32
    %c0_i32_0 = arith.constant 0 : i32
    %c0_i32_1 = arith.constant 0 : i32
    return %c0_i32, %c0_i32_0 : i32, i32
  }
  func.func @transform_3(%arg0: i32) -> (i32, i32) {
    %c0_i32 = arith.constant 0 : i32
    %c0_i32_0 = arith.constant 0 : i32
    %c0_i32_1 = arith.constant 0 : i32
    return %c0_i32, %c0_i32_0 : i32, i32
  }
  func.func @transform_4(%arg0: i32) -> (i32, i32) {
    %c0_i32 = arith.constant 0 : i32
    %c0_i32_0 = arith.constant 0 : i32
    return %arg0, %c0_i32 : i32, i32
  }
}

</mosaic_0001>

<llo_original>
// kernel: down_forward.1
$region0: #{down_forward.1}
  #allocation0 [shape = 'u32[]', space=smem, size = 0x4, offset = 0x4, fixed_abs, tag = 'smem constant byte address 0x4 - core index']
  #allocation1 [shape = 'u32[144,128]{1,0:T(1,128)}', space=vmem, size = 0x12000, scoped, tag = 'internal scratch']
  %s0 = inlined_call_operand.vmem [shape: bf16[4,16,128], index: 0, kind: input, shape index: {}]
  %s1 = inlined_call_operand.vmem [shape: bf16[1,128], index: 1, kind: input, shape index: {}]
  %s2 = inlined_call_operand.vmem [shape: bf16[1,128], index: 2, kind: input, shape index: {}]
  %s3 = inlined_call_operand.vmem [shape: bf16[128,256], index: 3, kind: input, shape index: {}]
  %s4 = inlined_call_operand.vmem [shape: bf16[16,256], index: 4, kind: output, shape index: {}]
  %s5 = sld [smem:[#allocation0]]
  $region26: #{down_forward.1} parent=0
    _
  %s7 = ssub.s32 1, %s5
  %s8 = scalar_select 0, %s7, %s5
  // Predicated region
  $region2: #{down_forward.1} parent=0 // pred_check
    _
  $region3: #{down_forward.1} parent=0 // pred_check_branch
    %10 = sbr.rel (0) target = $region5
  $region4: #{down_forward.1} parent=0 // pred_region
    _
  $region5: #{down_forward.1} parent=0 // pred_fallthru
    _
  // Predicated region
  $region6: #{down_forward.1} parent=0 // pred_check
    _
  $region7: #{down_forward.1} parent=0 // pred_check_branch
    %12 = sbr.rel (0) target = $region9
  $region8: #{down_forward.1} parent=0 // pred_region
    _
  $region9: #{down_forward.1} parent=0 // pred_fallthru
    _
  // Predicated region
  $region10: #{down_forward.1} parent=0 // pred_check
    _
  $region11: #{down_forward.1} parent=0 // pred_check_branch
    %14 = sbr.rel (0) target = $region13
  $region12: #{down_forward.1} parent=0 // pred_region
    _
  $region13: #{down_forward.1} parent=0 // pred_fallthru
    _
  // Predicated region
  $region14: #{down_forward.1} parent=0 // pred_check
    _
  $region15: #{down_forward.1} parent=0 // pred_check_branch
    %16 = sbr.rel (0) target = $region17
  $region16: #{down_forward.1} parent=0 // pred_region
    _
  $region17: #{down_forward.1} parent=0 // pred_fallthru
    _
  %v18 = vld [vmem:[%s1] sm:$0x1]
  %v19 = vld [vmem:[%s2] sm:$0x1]
  %v20 = vld [vmem:[%s3] sm:$0xff]
  %v21 = vld [vmem:[%s3 + $0x8] sm:$0xff]
  %v22 = vld [vmem:[%s3 + $0x10] sm:$0xff]
  %v23 = vld [vmem:[%s3 + $0x18] sm:$0xff]
  %v24 = vld [vmem:[%s3 + $0x20] sm:$0xff]
  %v25 = vld [vmem:[%s3 + $0x28] sm:$0xff]
  %v26 = vld [vmem:[%s3 + $0x30] sm:$0xff]
  %v27 = vld [vmem:[%s3 + $0x38] sm:$0xff]
  %v28 = vld [vmem:[%s3 + $0x40] sm:$0xff]
  %v29 = vld [vmem:[%s3 + $0x48] sm:$0xff]
  %v30 = vld [vmem:[%s3 + $0x50] sm:$0xff]
  %v31 = vld [vmem:[%s3 + $0x58] sm:$0xff]
  %v32 = vld [vmem:[%s3 + $0x60] sm:$0xff]
  %v33 = vld [vmem:[%s3 + $0x68] sm:$0xff]
  %v34 = vld [vmem:[%s3 + $0x70] sm:$0xff]
  %v35 = vld [vmem:[%s3 + $0x78] sm:$0xff]
  %v36 = vld [vmem:[%s0] sm:$0xf]
  %v37 = vld [vmem:[%s0 + $0x4] sm:$0xf]
  %v39 = vpack.i.b16 %v18, %v18
  %v41 = vlaneseq
  %v42 = vshrl.u32 %v41, 7
  %v43 = vsub.s32 0, %v42
  %v44 = vrot.slane %v39, %v43
  %v46 = vunpack.c.l.b16 %v44
  %v47 = vpack.c.b16 %v46, %v46
  %v49 = vmul.bf16 %v36, %v47
  %v50 = vmul.bf16 %v37, %v47
  %v52 = vpack.i.b16 %v19, %v19
  %v54 = vlaneseq
  %v55 = vshrl.u32 %v54, 7
  %v56 = vsub.s32 0, %v55
  %v57 = vrot.slane %v52, %v56
  %v59 = vunpack.c.l.b16 %v57
  %v60 = vpack.c.b16 %v59, %v59
  %v62 = vadd.bf16 %v49, %v60
  %v63 = vadd.bf16 %v50, %v60
  %v64 = vmax.bf16 %v62, 0
  %v65 = vmax.bf16 %v63, 0
  %v68 = vunpack.c.l.b16 %v64
  %v69 = vunpack.c.l.b16 %v65
  %v70 = vpack.c.b16 %v69, %v68
  %v88 = vunpack.c.l.b16 %v20
  %v89 = vunpack.c.h.b16 %v20
  %v90 = vunpack.c.l.b16 %v21
  %v91 = vunpack.c.h.b16 %v21
  %v92 = vunpack.c.l.b16 %v22
  %v93 = vunpack.c.h.b16 %v22
  %v94 = vunpack.c.l.b16 %v23
  %v95 = vunpack.c.h.b16 %v23
  %v96 = vunpack.c.l.b16 %v24
  %v97 = vunpack.c.h.b16 %v24
  %v98 = vunpack.c.l.b16 %v25
  %v99 = vunpack.c.h.b16 %v25
  %v100 = vunpack.c.l.b16 %v26
  %v101 = vunpack.c.h.b16 %v26
  %v102 = vunpack.c.l.b16 %v27
  %v103 = vunpack.c.h.b16 %v27
  %v104 = vunpack.c.l.b16 %v28
  %v105 = vunpack.c.h.b16 %v28
  %v106 = vunpack.c.l.b16 %v29
  %v107 = vunpack.c.h.b16 %v29
  %v108 = vunpack.c.l.b16 %v30
  %v109 = vunpack.c.h.b16 %v30
  %v110 = vunpack.c.l.b16 %v31
  %v111 = vunpack.c.h.b16 %v31
  %v112 = vunpack.c.l.b16 %v32
  %v113 = vunpack.c.h.b16 %v32
  %v114 = vunpack.c.l.b16 %v33
  %v115 = vunpack.c.h.b16 %v33
  %v116 = vunpack.c.l.b16 %v34
  %v117 = vunpack.c.h.b16 %v34
  %v118 = vunpack.c.l.b16 %v35
  %v119 = vunpack.c.h.b16 %v35
  %v120 = vpack.c.b16 %v90, %v88
  %v121 = vpack.c.b16 %v91, %v89
  %v122 = vpack.c.b16 %v94, %v92
  %v123 = vpack.c.b16 %v95, %v93
  %v124 = vpack.c.b16 %v98, %v96
  %v125 = vpack.c.b16 %v99, %v97
  %v126 = vpack.c.b16 %v102, %v100
  %v127 = vpack.c.b16 %v103, %v101
  %v128 = vpack.c.b16 %v106, %v104
  %v129 = vpack.c.b16 %v107, %v105
  %v130 = vpack.c.b16 %v110, %v108
  %v131 = vpack.c.b16 %v111, %v109
  %v132 = vpack.c.b16 %v114, %v112
  %v133 = vpack.c.b16 %v115, %v113
  %v134 = vpack.c.b16 %v118, %v116
  %v135 = vpack.c.b16 %v119, %v117
  %152 = vmatprep.subr.bf16.mxu0 %v121
  %153 = vmatpush1.bf16.msra.mxu0 %v120
  %154 = vmatprep.subr.bf16.mxu0 %v123
  %155 = vmatpush1.bf16.msra.mxu0 %v122
  %156 = vmatprep.subr.bf16.mxu0 %v125
  %157 = vmatpush1.bf16.msra.mxu0 %v124
  %158 = vmatprep.subr.bf16.mxu0 %v127
  %159 = vmatpush1.bf16.msra.mxu0 %v126
  %160 = vmatprep.subr.bf16.mxu0 %v129
  %161 = vmatpush1.bf16.msra.mxu0 %v128
  %162 = vmatprep.subr.bf16.mxu0 %v131
  %163 = vmatpush1.bf16.msra.mxu0 %v130
  %164 = vmatprep.subr.bf16.mxu0 %v133
  %165 = vmatpush1.bf16.msra.mxu0 %v132
  %166 = vmatprep.subr.bf16.mxu0 %v135
  %167 = vmatpush1.bf16.msra.mxu0 %v134
  %168 = vmatprep.subr.bf16.mxu0 0
  %169 = vmatpush1.bf16.msra.mxu0 0
  %170 = vmatprep.subr.bf16.mxu0 0
  %171 = vmatpush1.bf16.msra.mxu0 0
  %172 = vmatprep.subr.bf16.mxu0 0
  %173 = vmatpush1.bf16.msra.mxu0 0
  %174 = vmatprep.subr.bf16.mxu0 0
  %175 = vmatpush1.bf16.msra.mxu0 0
  %176 = vmatprep.subr.bf16.mxu0 0
  %177 = vmatpush1.bf16.msra.mxu0 0
  %178 = vmatprep.subr.bf16.mxu0 0
  %179 = vmatpush1.bf16.msra.mxu0 0
  %180 = vmatprep.subr.bf16.mxu0 0
  %181 = vmatpush1.bf16.msra.mxu0 0
  %182 = vmatprep.subr.bf16.mxu0 0
  %183 = vmatpush1.bf16.msra.mxu0 0
  %184 = vmatprep.mubr.bf16.mxu0 0
  %185 = vmatmul.mubr.bf16.gmra.mrb[0].mxu0 %v70
  %v186 = vpop.f32.mrb[0].mxu0
  %v187 = vadd.f32 0.0, %v186
  %v188 = vpop.f32.mrb[0].mxu0
  %v189 = vadd.f32 0.0, %v188
  %v190 = vpop.f32.mrb[0].mxu0
  %v191 = vadd.f32 0.0, %v190
  %v192 = vpop.f32.mrb[0].mxu0
  %v193 = vadd.f32 0.0, %v192
  %194 = vdwg.mxu0
  %s195 = scalar_lea.vmem %s0, 8
  %v196 = vld [vmem:[%s195] sm:$0xf]
  %v197 = vld [vmem:[%s195 + $0x4] sm:$0xf]
  %v198 = vmul.bf16 %v196, %v47
  %v199 = vmul.bf16 %v197, %v47
  %v200 = vadd.bf16 %v198, %v60
  %v201 = vadd.bf16 %v199, %v60
  %v202 = vmax.bf16 %v200, 0
  %v203 = vmax.bf16 %v201, 0
  %v206 = vunpack.c.l.b16 %v202
  %v207 = vunpack.c.l.b16 %v203
  %v208 = vpack.c.b16 %v207, %v206
  %210 = vmatprep.subr.bf16.mxu0 %v121
  %211 = vmatpush1.bf16.msra.mxu0 %v120
  %212 = vmatprep.subr.bf16.mxu0 %v123
  %213 = vmatpush1.bf16.msra.mxu0 %v122
  %214 = vmatprep.subr.bf16.mxu0 %v125
  %215 = vmatpush1.bf16.msra.mxu0 %v124
  %216 = vmatprep.subr.bf16.mxu0 %v127
  %217 = vmatpush1.bf16.msra.mxu0 %v126
  %218 = vmatprep.subr.bf16.mxu0 %v129
  %219 = vmatpush1.bf16.msra.mxu0 %v128
  %220 = vmatprep.subr.bf16.mxu0 %v131
  %221 = vmatpush1.bf16.msra.mxu0 %v130
  %222 = vmatprep.subr.bf16.mxu0 %v133
  %223 = vmatpush1.bf16.msra.mxu0 %v132
  %224 = vmatprep.subr.bf16.mxu0 %v135
  %225 = vmatpush1.bf16.msra.mxu0 %v134
  %226 = vmatprep.subr.bf16.mxu0 0
  %227 = vmatpush1.bf16.msra.mxu0 0
  %228 = vmatprep.subr.bf16.mxu0 0
  %229 = vmatpush1.bf16.msra.mxu0 0
  %230 = vmatprep.subr.bf16.mxu0 0
  %231 = vmatpush1.bf16.msra.mxu0 0
  %232 = vmatprep.subr.bf16.mxu0 0
  %233 = vmatpush1.bf16.msra.mxu0 0
  %234 = vmatprep.subr.bf16.mxu0 0
  %235 = vmatpush1.bf16.msra.mxu0 0
  %236 = vmatprep.subr.bf16.mxu0 0
  %237 = vmatpush1.bf16.msra.mxu0 0
  %238 = vmatprep.subr.bf16.mxu0 0
  %239 = vmatpush1.bf16.msra.mxu0 0
  %240 = vmatprep.subr.bf16.mxu0 0
  %241 = vmatpush1.bf16.msra.mxu0 0
  %242 = vmatprep.mubr.bf16.mxu0 0
  %243 = vmatmul.mubr.bf16.gmra.mrb[0].mxu0 %v208
  %v244 = vpop.f32.mrb[0].mxu0
  %v245 = vadd.f32 0.0, %v244
  %v246 = vpop.f32.mrb[0].mxu0
  %v247 = vadd.f32 0.0, %v246
  %v248 = vpop.f32.mrb[0].mxu0
  %v249 = vadd.f32 0.0, %v248
  %v250 = vpop.f32.mrb[0].mxu0
  %v251 = vadd.f32 0.0, %v250
  %252 = vdwg.mxu0
  %v253 = vmax.f32 %v187, %v245
  %v254 = vmax.f32 %v189, %v247
  %v255 = vmax.f32 %v191, %v249
  %v256 = vmax.f32 %v193, %v251
  %s257 = scalar_lea.vmem %s0, 16
  %v258 = vld [vmem:[%s257] sm:$0xf]
  %v259 = vld [vmem:[%s257 + $0x4] sm:$0xf]
  %v260 = vmul.bf16 %v258, %v47
  %v261 = vmul.bf16 %v259, %v47
  %v262 = vadd.bf16 %v260, %v60
  %v263 = vadd.bf16 %v261, %v60
  %v264 = vmax.bf16 %v262, 0
  %v265 = vmax.bf16 %v263, 0
  %v268 = vunpack.c.l.b16 %v264
  %v269 = vunpack.c.l.b16 %v265
  %v270 = vpack.c.b16 %v269, %v268
  %272 = vmatprep.subr.bf16.mxu0 %v121
  %273 = vmatpush1.bf16.msra.mxu0 %v120
  %274 = vmatprep.subr.bf16.mxu0 %v123
  %275 = vmatpush1.bf16.msra.mxu0 %v122
  %276 = vmatprep.subr.bf16.mxu0 %v125
  %277 = vmatpush1.bf16.msra.mxu0 %v124
  %278 = vmatprep.subr.bf16.mxu0 %v127
  %279 = vmatpush1.bf16.msra.mxu0 %v126
  %280 = vmatprep.subr.bf16.mxu0 %v129
  %281 = vmatpush1.bf16.msra.mxu0 %v128
  %282 = vmatprep.subr.bf16.mxu0 %v131
  %283 = vmatpush1.bf16.msra.mxu0 %v130
  %284 = vmatprep.subr.bf16.mxu0 %v133
  %285 = vmatpush1.bf16.msra.mxu0 %v132
  %286 = vmatprep.subr.bf16.mxu0 %v135
  %287 = vmatpush1.bf16.msra.mxu0 %v134
  %288 = vmatprep.subr.bf16.mxu0 0
  %289 = vmatpush1.bf16.msra.mxu0 0
  %290 = vmatprep.subr.bf16.mxu0 0
  %291 = vmatpush1.bf16.msra.mxu0 0
  %292 = vmatprep.subr.bf16.mxu0 0
  %293 = vmatpush1.bf16.msra.mxu0 0
  %294 = vmatprep.subr.bf16.mxu0 0
  %295 = vmatpush1.bf16.msra.mxu0 0
  %296 = vmatprep.subr.bf16.mxu0 0
  %297 = vmatpush1.bf16.msra.mxu0 0
  %298 = vmatprep.subr.bf16.mxu0 0
  %299 = vmatpush1.bf16.msra.mxu0 0
  %300 = vmatprep.subr.bf16.mxu0 0
  %301 = vmatpush1.bf16.msra.mxu0 0
  %302 = vmatprep.subr.bf16.mxu0 0
  %303 = vmatpush1.bf16.msra.mxu0 0
  %304 = vmatprep.mubr.bf16.mxu0 0
  %305 = vmatmul.mubr.bf16.gmra.mrb[0].mxu0 %v270
  %v306 = vpop.f32.mrb[0].mxu0
  %v307 = vadd.f32 0.0, %v306
  %v308 = vpop.f32.mrb[0].mxu0
  %v309 = vadd.f32 0.0, %v308
  %v310 = vpop.f32.mrb[0].mxu0
  %v311 = vadd.f32 0.0, %v310
  %v312 = vpop.f32.mrb[0].mxu0
  %v313 = vadd.f32 0.0, %v312
  %314 = vdwg.mxu0
  %v315 = vmax.f32 %v253, %v307
  %v316 = vmax.f32 %v254, %v309
  %v317 = vmax.f32 %v255, %v311
  %v318 = vmax.f32 %v256, %v313
  %s319 = scalar_lea.vmem %s0, 24
  %v320 = vld [vmem:[%s319] sm:$0xf]
  %v321 = vld [vmem:[%s319 + $0x4] sm:$0xf]
  %v322 = vmul.bf16 %v320, %v47
  %v323 = vmul.bf16 %v321, %v47
  %v324 = vadd.bf16 %v322, %v60
  %v325 = vadd.bf16 %v323, %v60
  %v326 = vmax.bf16 %v324, 0
  %v327 = vmax.bf16 %v325, 0
  %v330 = vunpack.c.l.b16 %v326
  %v331 = vunpack.c.l.b16 %v327
  %v332 = vpack.c.b16 %v331, %v330
  %334 = vmatprep.subr.bf16.mxu0 %v121
  %335 = vmatpush1.bf16.msra.mxu0 %v120
  %336 = vmatprep.subr.bf16.mxu0 %v123
  %337 = vmatpush1.bf16.msra.mxu0 %v122
  %338 = vmatprep.subr.bf16.mxu0 %v125
  %339 = vmatpush1.bf16.msra.mxu0 %v124
  %340 = vmatprep.subr.bf16.mxu0 %v127
  %341 = vmatpush1.bf16.msra.mxu0 %v126
  %342 = vmatprep.subr.bf16.mxu0 %v129
  %343 = vmatpush1.bf16.msra.mxu0 %v128
  %344 = vmatprep.subr.bf16.mxu0 %v131
  %345 = vmatpush1.bf16.msra.mxu0 %v130
  %346 = vmatprep.subr.bf16.mxu0 %v133
  %347 = vmatpush1.bf16.msra.mxu0 %v132
  %348 = vmatprep.subr.bf16.mxu0 %v135
  %349 = vmatpush1.bf16.msra.mxu0 %v134
  %350 = vmatprep.subr.bf16.mxu0 0
  %351 = vmatpush1.bf16.msra.mxu0 0
  %352 = vmatprep.subr.bf16.mxu0 0
  %353 = vmatpush1.bf16.msra.mxu0 0
  %354 = vmatprep.subr.bf16.mxu0 0
  %355 = vmatpush1.bf16.msra.mxu0 0
  %356 = vmatprep.subr.bf16.mxu0 0
  %357 = vmatpush1.bf16.msra.mxu0 0
  %358 = vmatprep.subr.bf16.mxu0 0
  %359 = vmatpush1.bf16.msra.mxu0 0
  %360 = vmatprep.subr.bf16.mxu0 0
  %361 = vmatpush1.bf16.msra.mxu0 0
  %362 = vmatprep.subr.bf16.mxu0 0
  %363 = vmatpush1.bf16.msra.mxu0 0
  %364 = vmatprep.subr.bf16.mxu0 0
  %365 = vmatpush1.bf16.msra.mxu0 0
  %366 = vmatprep.mubr.bf16.mxu0 0
  %367 = vmatmul.mubr.bf16.gmra.mrb[0].mxu0 %v332
  %v368 = vpop.f32.mrb[0].mxu0
  %v369 = vadd.f32 0.0, %v368
  %v370 = vpop.f32.mrb[0].mxu0
  %v371 = vadd.f32 0.0, %v370
  %v372 = vpop.f32.mrb[0].mxu0
  %v373 = vadd.f32 0.0, %v372
  %v374 = vpop.f32.mrb[0].mxu0
  %v375 = vadd.f32 0.0, %v374
  %376 = vdwg.mxu0
  %v377 = vmax.f32 %v315, %v369
  %v378 = vmax.f32 %v316, %v371
  %v379 = vmax.f32 %v317, %v373
  %v380 = vmax.f32 %v318, %v375
  %v381 = vpack.c.bf16 %v379, %v377
  %v382 = vpack.c.bf16 %v380, %v378
  %v385 = vunpack.c.l.b16 %v381
  %v386 = vunpack.c.l.b16 %v382
  %v387 = vunpack.c.h.b16 %v381
  %v388 = vunpack.c.h.b16 %v382
  %v389 = vpack.c.b16 %v386, %v385
  %v390 = vpack.c.b16 %v388, %v387
  %393 = vst [vmem:[%s4] sm:$0xff] %v389
  %394 = vst [vmem:[%s4 + $0x8] sm:$0xff] %v390
  // Predicated region
  $region18: #{down_forward.1} parent=0 // pred_check
    _
  $region19: #{down_forward.1} parent=0 // pred_check_branch
    %396 = sbr.rel (0) target = $region21
  $region20: #{down_forward.1} parent=0 // pred_region
    _
  $region21: #{down_forward.1} parent=0 // pred_fallthru
    _
  // Predicated region
  $region22: #{down_forward.1} parent=0 // pred_check
    _
  $region23: #{down_forward.1} parent=0 // pred_check_branch
    %398 = sbr.rel (0) target = $region25
  $region24: #{down_forward.1} parent=0 // pred_region
    _
  $region25: #{down_forward.1} parent=0 // pred_fallthru
    _

</llo_original>
